<compile_context>
chip_gen: v6e
topology: v6e:2x2x1
jax: 0.10.0
libtpu: 0.0.40
codegen_flags: <defaults>
</compile_context>

<pallas_src>
import jax
import jax.numpy as jnp
from jax.experimental import pallas as pl
from jax.experimental.pallas import tpu as pltpu


def _fused_tconv_lora_kernel(w_ref, x_ref, o_ref):
    # [Cout*kH*kW, Cin] @ [Cin, TP] -> [Cout*kH*kW, TP]; pixels sit on lanes.
    o_ref[...] = jnp.dot(w_ref[...], x_ref[...],
                         preferred_element_type=jnp.float32).astype(o_ref.dtype)


def _pick_pixel_tile(hw, ckk, cin, itemsize, vmem_budget_bytes, tp_cap):
    """Largest lane-aligned pixel tile that divides hw and fits the budget."""
    per_pixel = 2 * (ckk + cin) * itemsize          # double-buffered input + output
    target = min(tp_cap, max(128, vmem_budget_bytes // per_pixel))
    if hw <= target:
        return hw                                   # full-extent block is always legal
    target -= target % 128
    for cand in range(target, 0, -128):
        if hw % cand == 0:
            return cand
    # TODO(synk): no 128-aligned divisor of H*W; fall back to one tile per image.
    return hw


def lora_transpose_conv2d(x, w_tconv, w_lora_a, w_lora_b, *, stride=2,
                          alpha=16.0, r=4, compute_dtype=None,
                          pixel_tile_cap=4096,
                          vmem_block_budget=8 * 1024 * 1024):
    """Forward of LoRATransposeConv2d (eval mode, bias=False).

    x:        [N, Cin, H, W]        (NCHW)
    w_tconv:  [Cin, Cout, kH, kW]   (ConvTranspose2d weight; kH==kW==stride, pad=0)
    w_lora_a: [r, Cout, 1, 1]
    w_lora_b: [Cout, r, 1, 1]
    returns:  [N, Cout, H*stride, W*stride]  (NCHW)

    compute_dtype: optionally cast activations/weights (e.g. jnp.bfloat16) to
    halve HBM traffic on v6e/v7x; MXU accumulation stays float32 either way.
    """
    N, Cin, H, W = x.shape
    cin_w, Cout, kH, kW = w_tconv.shape
    assert Cin == cin_w and kH == stride and kW == stride, \
        "only the U-Net up-conv case (kernel_size == stride, padding == 0)"
    scaling = alpha / r

    # TODO(synk): Dropout2d is treated as identity (module in eval mode);
    # training-mode channel dropout is not implemented.

    # ---- fold LoRA into the transpose-conv weight (exact in eval mode) ----
    # per output pixel: out = base @ M, M = I + scaling * A^T B^T
    # => W_eff[c, o, k, l] = sum_o' W[c, o', k, l] * M[o', o]
    hi = jax.lax.Precision.HIGHEST                   # keep the fold in true f32
    A = w_lora_a.reshape(r, Cout).astype(jnp.float32)
    B = w_lora_b.reshape(Cout, r).astype(jnp.float32)
    M = (jnp.eye(Cout, dtype=jnp.float32)
         + scaling * jnp.matmul(A.T, B.T, precision=hi))           # [Cout, Cout]
    w_eff = jnp.einsum('cokl,op->cpkl', w_tconv.astype(jnp.float32), M,
                       precision=hi)                               # [Cin,Cout,kH,kW]
    # Lay the weight out as [(o, k, l), c] so the kernel computes W_eff^T @ X.
    w_perm = jnp.transpose(w_eff, (1, 2, 3, 0)).reshape(Cout * kH * kW, Cin)

    in_dtype = x.dtype
    if compute_dtype is not None:
        x = x.astype(compute_dtype)
        w_perm = w_perm.astype(compute_dtype)
    else:
        w_perm = w_perm.astype(in_dtype)

    CKK = Cout * kH * kW
    HW = H * W
    x3 = x.reshape(N, Cin, HW)      # free reshape: NCHW is already [Cin, pixels]

    itemsize = max(jnp.dtype(x3.dtype).itemsize, jnp.dtype(in_dtype).itemsize)
    tp = _pick_pixel_tile(HW, CKK, Cin, itemsize, vmem_block_budget,
                          pixel_tile_cap)

    out_t = pl.pallas_call(
        _fused_tconv_lora_kernel,
        out_shape=jax.ShapeDtypeStruct((N, CKK, HW), in_dtype),
        grid=(N, HW // tp),
        in_specs=[
            pl.BlockSpec((CKK, Cin), lambda n, i: (0, 0)),        # tiny weight, resident
            pl.BlockSpec((None, Cin, tp), lambda n, i: (n, 0, i)),
        ],
        out_specs=pl.BlockSpec((None, CKK, tp), lambda n, i: (n, 0, i)),
        compiler_params=pltpu.CompilerParams(
            dimension_semantics=("parallel", "parallel")),
    )(w_perm, x3)

    # ---- pixel shuffle: the single remaining XLA permute / HBM round trip ----
    # out_t[n, (o,k,l), h*W + w]  ->  out[n, o, h*kH + k, w*kW + l]
    out = out_t.reshape(N, Cout, kH, kW, H, W)
    out = jnp.transpose(out, (0, 1, 4, 2, 5, 3)).reshape(N, Cout, H * kH, W * kW)
    return out


def _reference(x, w_tconv, w_lora_a, w_lora_b, stride, alpha, r):
    """Plain-JAX reference matching PyTorch semantics (eval mode)."""
    N, Cin, H, W = x.shape
    _, Cout, kH, kW = w_tconv.shape
    scaling = alpha / r
    # ConvTranspose2d with kernel_size == stride, padding == 0:
    # out[n, o, i*s + k, j*s + l] = sum_c x[n, c, i, j] * w[c, o, k, l]
    contrib = jnp.einsum('ncij,cokl->noikjl', x, w_tconv)
    base = contrib.reshape(N, Cout, H * kH, W * kW)
    A = w_lora_a.reshape(r, Cout)
    B = w_lora_b.reshape(Cout, r)
    h = jnp.einsum('rc,nchw->nrhw', A, base)
    d = jnp.einsum('cr,nrhw->nchw', B, h)
    return base + d * scaling


if __name__ == "__main__":
    N, Cin, H, W = 2, 4, 16, 16
    Cout, ksize, stride = 8, 2, 2
    r, alpha = 4, 16.0

    key = jax.random.PRNGKey(0)
    k1, k2, k3, k4 = jax.random.split(key, 4)
    x = jax.random.normal(k1, (N, Cin, H, W), jnp.float32)
    # Deterministic synthetic parameters (shapes match the nn.Module __init__).
    w_tconv = 0.1 * jax.random.normal(k2, (Cin, Cout, ksize, ksize), jnp.float32)
    w_lora_a = 0.1 * jax.random.normal(k3, (r, Cout, 1, 1), jnp.float32)
    w_lora_b = 0.1 * jax.random.normal(k4, (Cout, r, 1, 1), jnp.float32)

    out = lora_transpose_conv2d(x, w_tconv, w_lora_a, w_lora_b,
                                stride=stride, alpha=alpha, r=r)
    out = jax.block_until_ready(out)

    ref = _reference(x, w_tconv, w_lora_a, w_lora_b, stride, alpha, r)
    assert out.shape == (N, Cout, H * stride, W * stride), out.shape
    assert jnp.allclose(out, ref, atol=1e-4, rtol=1e-4), "mismatch vs reference"
    print("KERNEL_OK")
</pallas_src>

<mosaic_0001>
module attributes {stable_mosaic.version = 11 : i64} {
  func.func @_fused_tconv_lora_kernel(%arg0: i32, %arg1: i32, %arg2: memref<32x4xf32, #tpu.memory_space<vmem>>, %arg3: memref<1x4x256xf32, #tpu.memory_space<vmem>>, %arg4: memref<1x32x256xf32, #tpu.memory_space<vmem>>) attributes {dimension_semantics = [#tpu.dimension_semantics<parallel>, #tpu.dimension_semantics<parallel>], iteration_bounds = array<i64: 2, 1>, scalar_prefetch = 0 : i64, scratch_operands = 0 : i64, tpu.core_type = #tpu.core_type<tc>, window_params = [{pipeline_mode = #tpu.pipeline_mode<synchronous>, transform_indices = @transform_0, window_bounds = array<i64: 32, 4>}, {transform_indices = @transform_1, window_bounds = array<i64: 1, 4, 256>}, {transform_indices = @transform_2, window_bounds = array<i64: 1, 32, 256>}]} {
    %c0 = arith.constant 0 : index
    %c0_0 = arith.constant 0 : index
    %0 = vector.load %arg2[%c0, %c0_0] : memref<32x4xf32, #tpu.memory_space<vmem>>, vector<32x4xf32>
    %c0_1 = arith.constant 0 : index
    %c0_2 = arith.constant 0 : index
    %c0_3 = arith.constant 0 : index
    %1 = vector.load %arg3[%c0_1, %c0_2, %c0_3] : memref<1x4x256xf32, #tpu.memory_space<vmem>>, vector<1x4x256xf32>
    %2 = vector.shape_cast %1 : vector<1x4x256xf32> to vector<4x256xf32>
    %cst = arith.constant dense<0.000000e+00> : vector<32x256xf32>
    %3 = tpu.matmul %0, %2, %cst {dimension_numbers = #tpu.dot_dimension_numbers<[1], [0], [0], [1], [0, 0, 1, 1], [], []>} : vector<32x4xf32>, vector<4x256xf32>, vector<32x256xf32> -> vector<32x256xf32>
    %c0_4 = arith.constant 0 : index
    %c0_5 = arith.constant 0 : index
    %c0_6 = arith.constant 0 : index
    %4 = vector.load %arg4[%c0_4, %c0_5, %c0_6] : memref<1x32x256xf32, #tpu.memory_space<vmem>>, vector<1x32x256xf32>
    %5 = vector.shape_cast %4 : vector<1x32x256xf32> to vector<32x256xf32>
    %6 = vector.shape_cast %3 : vector<32x256xf32> to vector<1x32x256xf32>
    tpu.vector_store %arg4[%c0_4, %c0_5, %c0_6], %6 {strides = array<i32>} : memref<1x32x256xf32, #tpu.memory_space<vmem>>, vector<1x32x256xf32>,
    return
  }
  func.func @transform_0(%arg0: i32, %arg1: i32) -> (i32, i32) {
    %c0_i32 = arith.constant 0 : i32
    %c0_i32_0 = arith.constant 0 : i32
    %c0_i32_1 = arith.constant 0 : i32
    return %c0_i32, %c0_i32_0 : i32, i32
  }
  func.func @transform_1(%arg0: i32, %arg1: i32) -> (i32, i32, i32) {
    %c0_i32 = arith.constant 0 : i32
    %c0_i32_0 = arith.constant 0 : i32
    return %arg0, %c0_i32, %arg1 : i32, i32, i32
  }
  func.func @transform_2(%arg0: i32, %arg1: i32) -> (i32, i32, i32) {
    %c0_i32 = arith.constant 0 : i32
    %c0_i32_0 = arith.constant 0 : i32
    return %arg0, %c0_i32, %arg1 : i32, i32, i32
  }
}

</mosaic_0001>

<llo_original>
// kernel: tpu_custom_call.1
$region0: #{tpu_custom_call.1}
  #allocation0 [shape = 'u32[]', space=smem, size = 0x4, offset = 0x4, fixed_abs, tag = 'smem constant byte address 0x4 - core index']
  #allocation1 [shape = 'u32[144,128]{1,0:T(1,128)}', space=vmem, size = 0x12000, scoped, tag = 'internal scratch']
  %s0 = inlined_call_operand.vmem [shape: f32[32,4], index: 0, kind: input, shape index: {}]
  %s1 = inlined_call_operand.vmem [shape: f32[2,4,256], index: 1, kind: input, shape index: {}]
  %s2 = inlined_call_operand.hbm [shape: f32[2,32,256], index: 2, kind: output, shape index: {}]
  %s3 = sld [smem:[#allocation0]]
  $region41: #{tpu_custom_call.1} parent=0
    _
  %s5 = ssub.s32 1, %s3
  %s6 = scalar_select 0, %s5, %s3
  $region1: #{tpu_custom_call.1} parent=0
    #allocation2 [shape = 'u8[65536]{0}', space=vmem, size = 0x10000, scoped, tag = 'output window, operand 0']
    #allocation3 [shape = 's32[2]{0}', space=sflag, size = 0x8, scoped, tag = 'scoped memory for tpu_custom_call.1']
    %7 = vsyncpa [#allocation3], 0
    %s8 = scalar_lea.sflag [#allocation3], 1
    %9 = vsyncpa %s8, 0
    loop: start=0, step=1, limit=4
    $region2: #{tpu_custom_call.1} parent=1 // loop_pre_header
      _
    $region3: #{tpu_custom_call.1} parent=1 // loop_header
      %s11 = sphi 0, %s15
      %p12 = scmp.ge.s32.totalorder %s11, 4
      %s18 = sphi 0, %s30
      %s19 = sphi 0, %s26
      %s20 = sphi 0, %s18
      %s21 = sphi 0, %s19
      %s22 = sphi 0, %s20
      %s23 = sphi 0, %s21
      %s31 = sphi 0, %s31
      %s33 = sphi 0, %s31
      %s34 = sphi 0, %s33
      %s48 = sphi 0, %s34
      %s56 = sphi 0, %s58
      %s59 = sphi 0, %s56
      %s60 = sphi 0, %s59
      %s76 = sphi 0, %s60
      %s84 = sphi 0, %s86
      %s87 = sphi 0, %s84
      %s88 = sphi 0, %s87
      %s104 = sphi 0, %s88
    $region4: #{tpu_custom_call.1} parent=1 // loop_header_branch
      %14 = sbr.rel (%p12) target = $region8
    $region5: #{tpu_custom_call.1} parent=1 // loop_body
      %s16 = ssub.s32 %s11, 1
      %s17 = ssub.s32 %s11, 2
      %s24 = sadd.s32 1, %s19
      %p25 = scmp.ge.s32.totalorder %s24, 1
      %s26 = scalar_select %p25, 0, %s24
      %s27 = sadd.s32 1, %s18
      %s28 = scalar_select %p25, %s27, %s18
      %p29 = scmp.ge.s32.totalorder %s28, 2
      %s30 = scalar_select %p29, 0, %s28
      %s32 = sadd.s32 %s31, 1
      %p35 = scmp.eq.s32.totalorder %s11, 1
      %p36 = scmp.ne.s32.totalorder %s31, %s33
      %p37 = scmp.eq.s32.totalorder %s11, 0
      %p38 = por %p36, %p37
      %p39 = scmp.ne.s32.totalorder %s31, %s33
      %p40 = scmp.eq.s32.totalorder %s16, 1
      %p41 = por %p39, %p40
      %p42 = scmp.ne.s32.totalorder %s33, %s34
      %p43 = scmp.eq.s32.totalorder %s16, 0
      %p44 = por %p42, %p43
      %p45 = scmp.ne.s32.totalorder %s33, %s34
      %p46 = scmp.eq.s32.totalorder %s17, 1
      %p47 = por %p45, %p46
      %p49 = scmp.ne.s32.totalorder %s34, %s48
      %p50 = scmp.eq.s32.totalorder %s17, 0
      %p51 = por %p49, %p50
      %s52 = ssub.s32 %s18, %s30
      %s53 = ssub.s32 %s19, %s26
      %s54 = sor.u32 %s52, %s53
      %p55 = scmp.eq.s32.totalorder %s54, 0
      %s57 = sadd.s32 %s56, 1
      %s58 = scalar_select %p55, %s56, %s57
      %p61 = pneg %p55
      %p62 = scmp.eq.s32.totalorder %s11, 1
      %p63 = por %p61, %p62
      %p64 = scmp.ne.s32.totalorder %s56, %s59
      %p65 = scmp.eq.s32.totalorder %s11, 0
      %p66 = por %p64, %p65
      %p67 = scmp.ne.s32.totalorder %s56, %s59
      %p68 = scmp.eq.s32.totalorder %s16, 1
      %p69 = por %p67, %p68
      %p70 = scmp.ne.s32.totalorder %s59, %s60
      %p71 = scmp.eq.s32.totalorder %s16, 0
      %p72 = por %p70, %p71
      %p73 = scmp.ne.s32.totalorder %s59, %s60
      %p74 = scmp.eq.s32.totalorder %s17, 1
      %p75 = por %p73, %p74
      %p77 = scmp.ne.s32.totalorder %s60, %s76
      %p78 = scmp.eq.s32.totalorder %s17, 0
      %p79 = por %p77, %p78
      %s80 = ssub.s32 %s18, %s30
      %s81 = ssub.s32 %s19, %s26
      %s82 = sor.u32 %s80, %s81
      %p83 = scmp.eq.s32.totalorder %s82, 0
      %s85 = sadd.s32 %s84, 1
      %s86 = scalar_select %p83, %s84, %s85
      %p89 = pneg %p83
      %p90 = scmp.eq.s32.totalorder %s11, 1
      %p91 = por %p89, %p90
      %p92 = scmp.ne.s32.totalorder %s84, %s87
      %p93 = scmp.eq.s32.totalorder %s11, 0
      %p94 = por %p92, %p93
      %p95 = scmp.ne.s32.totalorder %s84, %s87
      %p96 = scmp.eq.s32.totalorder %s16, 1
      %p97 = por %p95, %p96
      %p98 = scmp.ne.s32.totalorder %s87, %s88
      %p99 = scmp.eq.s32.totalorder %s16, 0
      %p100 = por %p98, %p99
      %p101 = scmp.ne.s32.totalorder %s87, %s88
      %p102 = scmp.eq.s32.totalorder %s17, 1
      %p103 = por %p101, %p102
      %p105 = scmp.ne.s32.totalorder %s88, %s104
      %p106 = scmp.eq.s32.totalorder %s17, 0
      %p107 = por %p105, %p106
      %p108 = scmp.le.s32.totalorder 1, %s11
      %p109 = scmp.lt.s32.totalorder %s11, 3
      %p110 = pnand %p108, %p109
      %p111 = pneg %p110
      // Predicated region
      $region9: #{tpu_custom_call.1} parent=5 // pred_check
        _
      $region10: #{tpu_custom_call.1} parent=5 // pred_check_branch
        %113 = sbr.rel (%p110) target = $region12
      $region11: #{tpu_custom_call.1} parent=5 // pred_region
        %s114 = ssub.s32 %s11, 1
        // Predicated region
        $region13: #{tpu_custom_call.1} parent=11 // pred_check
          %p115 = pneg %p44
        $region14: #{tpu_custom_call.1} parent=11 // pred_check_branch
          %117 = sbr.rel (%p115) target = $region16
        $region15: #{tpu_custom_call.1} parent=11 // pred_region
          _
        $region16: #{tpu_custom_call.1} parent=11 // pred_fallthru
          _
      $region12: #{tpu_custom_call.1} parent=5 // pred_fallthru
        _
      %p118 = scmp.lt.s32.totalorder %s11, 2
      // Predicated region
      $region17: #{tpu_custom_call.1} parent=5 // pred_check
        %p119 = pneg %p118
      $region18: #{tpu_custom_call.1} parent=5 // pred_check_branch
        %121 = sbr.rel (%p119) target = $region20
      $region19: #{tpu_custom_call.1} parent=5 // pred_region
        // Predicated region
        $region21: #{tpu_custom_call.1} parent=19 // pred_check
          %p122 = pneg %p66
        $region22: #{tpu_custom_call.1} parent=19 // pred_check_branch
          %124 = sbr.rel (%p122) target = $region24
        $region23: #{tpu_custom_call.1} parent=19 // pred_region
          %s125 = smul.u32 2, %s19
          %p126 = scmp.lt.s32.totalorder %s18, 1
          %s127 = scalar_select %p126, %s18, 1
          %p128 = scmp.lt.s32.totalorder %s125, 1
          %s129 = scalar_select %p128, %s125, 1
          %s130 = smul.addr %s127, 2
          %s131 = sadd.s32 %s129, %s130
          %s132 = smul.addr %s131, 4
          %s133 = scalar_lea.vmem %s1, %s132
          %s134 = smul.u32 2, %s19
        $region24: #{tpu_custom_call.1} parent=19 // pred_fallthru
          _
      $region20: #{tpu_custom_call.1} parent=5 // pred_fallthru
        _
      %p135 = scmp.le.s32.totalorder 1, %s11
      %p136 = scmp.lt.s32.totalorder %s11, 3
      %p137 = pnand %p135, %p136
      %p138 = pneg %p137
      // Predicated region
      $region25: #{tpu_custom_call.1} parent=5 // pred_check
        _
      $region26: #{tpu_custom_call.1} parent=5 // pred_check_branch
        %140 = sbr.rel (%p137) target = $region28
      $region27: #{tpu_custom_call.1} parent=5 // pred_region
        %s141 = ssub.s32 %s11, 1
        %p142 = pneg %p44
        %p143 = pneg %p41
        %s144 = smul.u32 2, %s21
        %p145 = scmp.lt.s32.totalorder %s20, 1
        %s146 = scalar_select %p145, %s20, 1
        %p147 = scmp.lt.s32.totalorder %s144, 1
        %s148 = scalar_select %p147, %s144, 1
        %s149 = smul.addr %s146, 2
        %s150 = sadd.s32 %s148, %s149
        %s151 = smul.addr %s150, 4
        %s152 = scalar_lea.vmem %s1, %s151
        %p153 = pneg %p72
        %p154 = pneg %p69
        %p155 = pneg %p100
        %p156 = pneg %p97
        %s157 = sand.u32 %s87, 1
        %s158 = scalar_lea.sflag [#allocation3], %s157
        %s159 = sand.u32 %s87, 1
        %s160 = smul.addr %s159, 64
        %s161 = scalar_lea.vmem [#allocation2], %s160
        %s162 = smul.u32 2, %s21
        %p163 = scmp.lt.s32.totalorder %s20, 1
        %s164 = scalar_select %p163, %s20, 1
        %p165 = scmp.lt.s32.totalorder %s162, 1
        %s166 = scalar_select %p165, %s162, 1
        %s167 = smul.addr %s164, 2
        %s168 = sadd.s32 %s166, %s167
        %s169 = smul.addr %s168, 4
        %s170 = scalar_lea.vmem %s1, %s169
        %s171 = smul.u32 2, %s21
        %s172 = smul.u32 2, %s21
        %v173 = vld [vmem:[%s0] sm:$0xff]
        %v174 = vld [vmem:[%s0 + $0x8] sm:$0xff]
        %v175 = vld [vmem:[%s0 + $0x10] sm:$0xff]
        %v176 = vld [vmem:[%s0 + $0x18] sm:$0xff]
        %v177 = vld [vmem:[%s170] sm:$0xff]
        %v179 = vcombine.high %v177, %v177
        %vm180 = vcmask 31744
        %v182 = vsel %vm180, %v173, 0
        %v185 = vsel %vm180, %v174, 0
        %v188 = vsel %vm180, %v175, 0
        %v191 = vsel %vm180, %v176, 0
        %vm193 = vcmask 1043456
        %v194 = vsel %vm193, %v177, 0
        %v196 = vsel %vm193, %v179, 0
        %198 = vmatprep.subr.mxu0 0.0
        %199 = vmatpush1.msra.mxu0 0.0
        %200 = vmatprep.subr.mxu0 0.0
        %201 = vmatpush1.msra.mxu0 0.0
        %202 = vmatprep.subr.mxu0 0.0
        %203 = vmatpush1.msra.mxu0 0.0
        %204 = vmatprep.subr.mxu0 0.0
        %205 = vmatpush1.msra.mxu0 0.0
        %206 = vmatprep.subr.mxu0 0.0
        %207 = vmatpush1.msra.mxu0 0.0
        %208 = vmatprep.subr.mxu0 0.0
        %209 = vmatpush1.msra.mxu0 0.0
        %210 = vmatprep.subr.mxu0 0.0
        %211 = vmatpush1.msra.mxu0 0.0
        %212 = vmatprep.subr.mxu0 0.0
        %213 = vmatpush1.msra.mxu0 0.0
        %214 = vmatprep.subr.mxu0 0.0
        %215 = vmatpush1.msra.mxu0 0.0
        %216 = vmatprep.subr.mxu0 0.0
        %217 = vmatpush1.msra.mxu0 0.0
        %218 = vmatprep.subr.mxu0 0.0
        %219 = vmatpush1.msra.mxu0 0.0
        %220 = vmatprep.subr.mxu0 0.0
        %221 = vmatpush1.msra.mxu0 0.0
        %222 = vmatprep.subr.mxu0 0.0
        %223 = vmatpush1.msra.mxu0 0.0
        %224 = vmatprep.subr.mxu0 0.0
        %225 = vmatpush1.msra.mxu0 0.0
        %226 = vmatprep.subr.mxu0 0.0
        %227 = vmatpush1.msra.mxu0 0.0
        %228 = vmatprep.subr.mxu0 %v196
        %229 = vmatpush1.msra.mxu0 %v194
        %230 = vmatprep.subr.mxu0 0.0
        %231 = vmatpush2.msra.mxu0 0.0
        %232 = vmatprep.subr.mxu0 0.0
        %233 = vmatpush2.msra.mxu0 0.0
        %234 = vmatprep.subr.mxu0 0.0
        %235 = vmatpush2.msra.mxu0 0.0
        %236 = vmatprep.subr.mxu0 0.0
        %237 = vmatpush2.msra.mxu0 0.0
        %238 = vmatprep.subr.mxu0 0.0
        %239 = vmatpush2.msra.mxu0 0.0
        %240 = vmatprep.subr.mxu0 0.0
        %241 = vmatpush2.msra.mxu0 0.0
        %242 = vmatprep.subr.mxu0 0.0
        %243 = vmatpush2.msra.mxu0 0.0
        %244 = vmatprep.subr.mxu0 0.0
        %245 = vmatpush2.msra.mxu0 0.0
        %246 = vmatprep.subr.mxu0 0.0
        %247 = vmatpush2.msra.mxu0 0.0
        %248 = vmatprep.subr.mxu0 0.0
        %249 = vmatpush2.msra.mxu0 0.0
        %250 = vmatprep.subr.mxu0 0.0
        %251 = vmatpush2.msra.mxu0 0.0
        %252 = vmatprep.subr.mxu0 0.0
        %253 = vmatpush2.msra.mxu0 0.0
        %254 = vmatprep.subr.mxu0 0.0
        %255 = vmatpush2.msra.mxu0 0.0
        %256 = vmatprep.subr.mxu0 0.0
        %257 = vmatpush2.msra.mxu0 0.0
        %258 = vmatprep.subr.mxu0 0.0
        %259 = vmatpush2.msra.mxu0 0.0
        %260 = vmatprep.subr.mxu0 0.0
        %261 = vmatpush2.msra.mxu0 0.0
        %262 = vmatprep.mubr.f32.mxu0 0.0
        %263 = vmatmul.mubr.f32.gmra.mxu0 %v182
        %v264 = vpop.f32.mrf.mxu0
        %v265 = vadd.f32 0.0, %v264
        %v266 = vpop.f32.mrf.mxu0
        %v267 = vadd.f32 0.0, %v266
        %268 = vmatprep.mubr.f32.mxu0 0.0
        %269 = vmatmul.mubr.f32.gmra.mxu0 %v185
        %v270 = vpop.f32.mrf.mxu0
        %v271 = vadd.f32 0.0, %v270
        %v272 = vpop.f32.mrf.mxu0
        %v273 = vadd.f32 0.0, %v272
        %274 = vmatprep.mubr.f32.mxu0 0.0
        %275 = vmatmul.mubr.f32.gmra.mxu0 %v188
        %v276 = vpop.f32.mrf.mxu0
        %v277 = vadd.f32 0.0, %v276
        %v278 = vpop.f32.mrf.mxu0
        %v279 = vadd.f32 0.0, %v278
        %280 = vmatprep.mubr.f32.mxu0 0.0
        %281 = vmatmul.mubr.f32.gmra.mxu0 %v191
        %v282 = vpop.f32.mrf.mxu0
        %v283 = vadd.f32 0.0, %v282
        %v284 = vpop.f32.mrf.mxu0
        %v285 = vadd.f32 0.0, %v284
        %286 = vdwg.mxu0
        %287 = vst [vmem:[%s161] sm:$0xff] %v265
        %288 = vst [vmem:[%s161 + $0x8] sm:$0xff] %v267
        %289 = vst [vmem:[%s161 + $0x10] sm:$0xff] %v271
        %290 = vst [vmem:[%s161 + $0x18] sm:$0xff] %v273
        %291 = vst [vmem:[%s161 + $0x20] sm:$0xff] %v277
        %292 = vst [vmem:[%s161 + $0x28] sm:$0xff] %v279
        %293 = vst [vmem:[%s161 + $0x30] sm:$0xff] %v283
        %294 = vst [vmem:[%s161 + $0x38] sm:$0xff] %v285
        %s295 = sand.u32 %s87, 1
        %s296 = scalar_lea.sflag [#allocation3], %s295
        %s297 = sand.u32 %s87, 1
        %s298 = smul.addr %s297, 64
        %s299 = scalar_lea.vmem [#allocation2], %s298
        // Predicated region
        $region29: #{tpu_custom_call.1} parent=27 // pred_check
          %p300 = pneg %p97
        $region30: #{tpu_custom_call.1} parent=27 // pred_check_branch
          %302 = sbr.rel (%p300) target = $region32
        $region31: #{tpu_custom_call.1} parent=27 // pred_region
          %s303 = smul.u32 2, %s21
          %s305 = ssub.s32 1024, 1024
          %306 = vsyncadd %s296, %s305
          %s307 = smul.addr %s20, 8
          %s308 = sadd.s32 %s303, %s307
          %s309 = smul.addr %s308, 128
          %s310 = scalar_lea.hbm %s2, %s309
          %s311 = sshll.u32 %s299, 4
          %s312 = int_to_ptr.vmem [resolvable:$true] %s311
          %317 = dma.vmem_to_hbm [thread:$0]  %s312, 1024, %s310, %s296, 256, 256, 16
        $region32: #{tpu_custom_call.1} parent=27 // pred_fallthru
          _
      $region28: #{tpu_custom_call.1} parent=5 // pred_fallthru
        _
      %p318 = scmp.le.s32.totalorder 2, %s11
      // Predicated region
      $region33: #{tpu_custom_call.1} parent=5 // pred_check
        %p319 = pneg %p318
      $region34: #{tpu_custom_call.1} parent=5 // pred_check_branch
        %321 = sbr.rel (%p319) target = $region36
      $region35: #{tpu_custom_call.1} parent=5 // pred_region
        %s322 = ssub.s32 %s11, 2
        // Predicated region
        $region37: #{tpu_custom_call.1} parent=35 // pred_check
          %p323 = pneg %p103
        $region38: #{tpu_custom_call.1} parent=35 // pred_check_branch
          %325 = sbr.rel (%p323) target = $region40
        $region39: #{tpu_custom_call.1} parent=35 // pred_region
          %s326 = sand.u32 %s88, 1
          %s327 = scalar_lea.sflag [#allocation3], %s326
          %s328 = sand.u32 %s88, 1
          %s329 = smul.addr %s328, 64
          %s330 = scalar_lea.vmem [#allocation2], %s329
          %331 = dma.done %s327, 1024
        $region40: #{tpu_custom_call.1} parent=35 // pred_fallthru
          _
      $region36: #{tpu_custom_call.1} parent=5 // pred_fallthru
        _
    $region6: #{tpu_custom_call.1} parent=1 // loop_footer
      %s15 = sadd.s32 1, %s11
    $region7: #{tpu_custom_call.1} parent=1 // loop_footer_branch
      %10 = sbr.rel target = $region3
    $region8: #{tpu_custom_call.1} parent=1 // loop_exit
      _
    %332 = vsyncpa [#allocation3], 1
    %s333 = scalar_lea.sflag [#allocation3], 1
    %334 = vsyncpa %s333, 1

</llo_original>
